<compile_context>
chip_gen: v5e
topology: v5e:2x2
jax: 0.10.0
libtpu: 0.0.40
codegen_flags: <defaults>
</compile_context>

<pallas_src>
import functools
import numpy as np
import jax
import jax.numpy as jnp
from jax.experimental import pallas as pl
from jax.experimental.pallas import tpu as pltpu


def _text_dist_kernel(temp_ref, s_ref, t_ref, w_ref, v_ref, c_ref,
                      loss_part_ref, center_part_ref,
                      loss_acc, center_acc, *, inv_student_temp):
    """Processes one (B, T, D) token tile.

    temp_ref        : SMEM (1,)       f32  teacher temperature for this epoch
    s_ref, t_ref    : VMEM (B, T, D)  any  student / teacher logits tile (native dtype)
    w_ref           : VMEM (B, T, 1)  f32  per-token loss weight = mask/(clamp(mask_sum,1)*B)
    v_ref           : VMEM (B, T, 1)  f32  1 for real tokens, 0 for padded tokens
    c_ref           : VMEM (1, 1, D)  f32  current center
    loss_part_ref   : VMEM (1, 1, 1)  f32  per-partition partial loss (written last step)
    center_part_ref : VMEM (1, 1, D)  f32  per-partition sum_(b,n) t_prob (written last step)
    loss_acc        : VMEM (1, 1, 1)  f32  scratch accumulator
    center_acc      : VMEM (1, 1, D)  f32  scratch accumulator
    """
    i = pl.program_id(1)

    @pl.when(i == 0)
    def _init():
        loss_acc[...] = jnp.zeros_like(loss_acc)
        center_acc[...] = jnp.zeros_like(center_acc)

    inv_temp = 1.0 / temp_ref[0]                                   # one scalar divide/step

    s = s_ref[...].astype(jnp.float32) * inv_student_temp          # (B,T,D)
    c = c_ref[...].astype(jnp.float32)                             # (1,1,D)

    # teacher softmax pieces; t_prob itself is never materialized (1/Z and the
    # token-valid flag are folded into per-row scalars).
    tl = (t_ref[...].astype(jnp.float32) - c) * inv_temp
    t_max = jnp.max(tl, axis=-1, keepdims=True)
    t_un = jnp.exp(tl - t_max)                                     # (B,T,D)
    t_sum = jnp.sum(t_un, axis=-1, keepdims=True)                  # (B,T,1)
    inv_z = pl.reciprocal(t_sum, approx=True)                      # EUP seed
    inv_z = inv_z * (2.0 - t_sum * inv_z)                          # one Newton step -> ~exact

    # student log-softmax pieces, no full (B,T,D) log_p materialization:
    #   -sum(t_prob * log_p) = lse * sum(t_prob) - sum(t_prob * s_sh)
    s_max = jnp.max(s, axis=-1, keepdims=True)
    s_sh = s - s_max
    lse = jnp.log(jnp.sum(jnp.exp(s_sh), axis=-1, keepdims=True))  # (B,T,1)
    cross = jnp.sum(t_un * s_sh, axis=-1, keepdims=True) * inv_z   # (B,T,1)
    prob_sum = t_sum * inv_z                                       # (B,T,1) == sum(t_prob)
    loss_tok = lse * prob_sum - cross                              # (B,T,1)

    # masked + pre-normalized loss contribution of this tile
    tile_loss = jnp.sum(loss_tok * w_ref[...], axis=1, keepdims=True)   # (B,1,1)
    loss_acc[...] += jnp.sum(tile_loss, axis=0, keepdims=True)          # (1,1,1)

    # center accumulation: sum of t_prob over all *real* tokens of this tile,
    # expressed as a per-row-scaled sum of the unnormalized exps.
    row_scale = inv_z * v_ref[...]                                      # (B,T,1)
    csum = jnp.sum(t_un * row_scale, axis=1, keepdims=True)             # (B,1,D)
    center_acc[...] += jnp.sum(csum, axis=0, keepdims=True)             # (1,1,D)

    @pl.when(i == pl.num_programs(1) - 1)
    def _finalize():
        loss_part_ref[...] = loss_acc[...]
        center_part_ref[...] = center_acc[...]


def _choose_token_tile(batch, dim, itemsize, n_tokens, n_partitions):
    # Per token of tile:
    #   student + teacher blocks, double-buffered : 2 * 2 * batch * dim * itemsize bytes
    #   f32 compute temporaries (t_un, s_sh, ...) : ~6 * batch * dim * 4 bytes
    per_token = batch * dim * (4 * itemsize + 24)
    budget = 24 * 1024 * 1024              # leaves headroom even on v7x's 64 MiB VMEM
    tile = max(16, min(512, budget // max(per_token, 1)))
    per_core = -(-n_tokens // n_partitions)
    tile = min(tile, max(16, -(-per_core // 16) * 16))
    return int(tile // 16) * 16


def text_distillation_forward(student, teacher, mask, center, temp, *,
                              student_temp, center_momentum,
                              token_tile=None, n_parallel=2):
    """Pure forward pass: returns (loss, new_center).  Single device (all_reduce == identity)."""
    B, N, D = student.shape
    mask_f = mask.astype(jnp.float32)                                       # (B, N)
    # fold the per-sample clamped mean and the batch mean into per-token weights (tiny host op)
    w = mask_f / (jnp.maximum(jnp.sum(mask_f, axis=-1, keepdims=True), 1.0) * B)

    P = int(n_parallel)
    itemsize = jnp.dtype(student.dtype).itemsize
    if token_tile is None:
        token_tile = _choose_token_tile(B, D, itemsize, N, P)
    T = int(token_tile)
    nt = -(-N // (P * T))                        # inner grid steps per partition
    n_pad = P * T * nt - N

    def pad_tokens(x):
        if n_pad == 0:
            return x
        cfg = ((0, 0), (0, n_pad)) + ((0, 0),) * (x.ndim - 2)
        return jnp.pad(x, cfg)

    student_p = pad_tokens(student)
    teacher_p = pad_tokens(teacher)
    w_p = pad_tokens(w)[..., None]                                          # (B, Np, 1)
    valid_p = pad_tokens(jnp.ones((B, N), jnp.float32))[..., None]          # (B, Np, 1)
    center_f = center.astype(jnp.float32)
    temp_arr = jnp.asarray(temp, jnp.float32).reshape((1,))

    est_bytes = 2 * 2 * B * T * D * itemsize + 8 * B * T * D * 4 + (2 << 20)
    vmem_limit = int(min(56 << 20, max(32 << 20, est_bytes)))

    kernel = functools.partial(_text_dist_kernel,
                               inv_student_temp=1.0 / float(student_temp))
    tok_map = lambda p, i: (0, p * nt + i, 0)

    loss_parts, center_parts = pl.pallas_call(
        kernel,
        out_shape=(jax.ShapeDtypeStruct((P, 1, 1), jnp.float32),
                   jax.ShapeDtypeStruct((P, 1, D), jnp.float32)),
        grid=(P, nt),
        in_specs=[
            pl.BlockSpec(memory_space=pltpu.MemorySpace.SMEM),   # temp scalar
            pl.BlockSpec((B, T, D), tok_map),                    # student tile (native dtype)
            pl.BlockSpec((B, T, D), tok_map),                    # teacher tile (native dtype)
            pl.BlockSpec((B, T, 1), tok_map),                    # loss weights
            pl.BlockSpec((B, T, 1), tok_map),                    # token-valid mask
            pl.BlockSpec((1, 1, D), lambda p, i: (0, 0, 0)),     # center (resident)
        ],
        out_specs=(
            pl.BlockSpec((1, 1, 1), lambda p, i: (p, 0, 0)),
            pl.BlockSpec((1, 1, D), lambda p, i: (p, 0, 0)),
        ),
        scratch_shapes=[pltpu.VMEM((1, 1, 1), jnp.float32),
                        pltpu.VMEM((1, 1, D), jnp.float32)],
        compiler_params=pltpu.CompilerParams(
            dimension_semantics=("parallel", "arbitrary"),
            vmem_limit_bytes=vmem_limit),
    )(temp_arr, student_p, teacher_p, w_p, valid_p, center_f)

    loss = jnp.sum(loss_parts)
    # tiny epilogue: combine per-partition partials, then the (1, D) center EMA.
    # TODO(synk): dist.all_reduce(patch_center) across devices treated as single-device identity.
    patch_center = jnp.sum(center_parts, axis=0) / (B * N)                  # (1, D)
    new_center = center_f * center_momentum + patch_center[None] * (1.0 - center_momentum)
    return loss, new_center


class TextDistillationLoss:
    """JAX/Pallas port of the PyTorch TextDistillationLoss forward pass (single device)."""

    def __init__(self, out_dim, patch_out_dim, warmup_teacher_temp, teacher_temp,
                 warmup_teacher_temp_epochs, nepochs, student_temp=0.1,
                 center_momentum=0.9, mim_start_epoch=0):
        self.student_temp = float(student_temp)
        self.center_momentum = float(center_momentum)
        self.patch_out_dim = int(patch_out_dim)
        self.center = jnp.zeros((1, 1, patch_out_dim), jnp.float32)
        if mim_start_epoch == 0:
            self.teacher_temp_schedule = np.concatenate((
                np.linspace(warmup_teacher_temp, teacher_temp, warmup_teacher_temp_epochs),
                np.ones(nepochs - warmup_teacher_temp_epochs) * teacher_temp))
        else:
            self.teacher_temp_schedule = np.concatenate((
                np.ones(mim_start_epoch) * warmup_teacher_temp,
                np.linspace(warmup_teacher_temp, teacher_temp, warmup_teacher_temp_epochs),
                np.ones(nepochs - warmup_teacher_temp_epochs - mim_start_epoch) * teacher_temp))

    def __call__(self, student_output, teacher_output, mask, epoch,
                 token_tile=None, n_parallel=2):
        temp = float(self.teacher_temp_schedule[epoch])
        loss, new_center = text_distillation_forward(
            student_output, teacher_output, mask, self.center, temp,
            student_temp=self.student_temp, center_momentum=self.center_momentum,
            token_tile=token_tile, n_parallel=n_parallel)
        # TODO(synk): stateful buffer update is not jit/grad friendly (forward-only port).
        self.center = new_center
        return loss


def _reference(student_f32, teacher_f32, mask, center, temp, student_temp, center_momentum):
    s = student_f32 / student_temp
    t_prob = jax.nn.softmax((teacher_f32 - center) / temp, axis=-1)
    log_p = jax.nn.log_softmax(s, axis=-1)
    loss = jnp.sum(-t_prob * log_p, axis=-1)
    m = mask.astype(jnp.float32)
    loss = jnp.sum(loss * m, axis=-1) / jnp.maximum(jnp.sum(m, axis=-1), 1.0)
    loss = jnp.mean(loss)
    patch_center = jnp.sum(jnp.mean(t_prob, axis=1), axis=0, keepdims=True) / student_f32.shape[0]
    new_center = center * center_momentum + patch_center[None] * (1.0 - center_momentum)
    return loss, new_center


if __name__ == "__main__":
    key = jax.random.PRNGKey(0)
    B, N, D = 2, 56, 256            # batch, tokens, patch_out_dim (D multiple of 128)
    k1, k2, k3 = jax.random.split(key, 3)
    student = jax.random.normal(k1, (B, N, D), jnp.float32).astype(jnp.bfloat16)
    teacher = jax.random.normal(k2, (B, N, D), jnp.float32).astype(jnp.bfloat16)
    mask = jax.random.uniform(k3, (B, N)) > 0.5

    module = TextDistillationLoss(out_dim=D, patch_out_dim=D,
                                  warmup_teacher_temp=0.04, teacher_temp=0.07,
                                  warmup_teacher_temp_epochs=5, nepochs=10)
    epoch = 3
    init_center = module.center
    temp = float(module.teacher_temp_schedule[epoch])

    # token_tile=16 -> grid = (2 partitions x 2 token tiles) plus 8 padded tokens:
    # exercises accumulation across grid steps, finalization and the padding/valid path.
    loss = module(student, teacher, mask, epoch, token_tile=16)
    jax.block_until_ready(loss)
    jax.block_until_ready(module.center)

    ref_loss, ref_center = _reference(student.astype(jnp.float32),
                                      teacher.astype(jnp.float32),
                                      mask, init_center, temp,
                                      module.student_temp, module.center_momentum)
    assert abs(float(loss) - float(ref_loss)) < 2e-2 * max(1.0, abs(float(ref_loss))), \
        (float(loss), float(ref_loss))
    assert float(jnp.max(jnp.abs(module.center - ref_center))) < 1e-4

    print("KERNEL_OK")
</pallas_src>

<mosaic_0001>
module attributes {stable_mosaic.version = 11 : i64} {
  func.func @_text_dist_kernel(%arg0: i32, %arg1: i32, %arg2: memref<1xf32, #tpu.memory_space<smem>>, %arg3: memref<2x16x256xbf16, #tpu.memory_space<vmem>>, %arg4: memref<2x16x256xbf16, #tpu.memory_space<vmem>>, %arg5: memref<2x16x1xf32, #tpu.memory_space<vmem>>, %arg6: memref<2x16x1xf32, #tpu.memory_space<vmem>>, %arg7: memref<1x1x256xf32, #tpu.memory_space<vmem>>, %arg8: memref<1x1x1xf32, #tpu.memory_space<vmem>>, %arg9: memref<1x1x256xf32, #tpu.memory_space<vmem>>, %arg10: memref<1x1x1xf32, #tpu.memory_space<vmem>>, %arg11: memref<1x1x256xf32, #tpu.memory_space<vmem>>) attributes {dimension_semantics = [#tpu.dimension_semantics<parallel>, #tpu.dimension_semantics<arbitrary>], iteration_bounds = array<i64: 2, 2>, scalar_prefetch = 0 : i64, scratch_operands = 2 : i64, tpu.core_type = #tpu.core_type<tc>, window_params = [{transform_indices = @transform_0, window_bounds = array<i64: 1>}, {transform_indices = @transform_1, window_bounds = array<i64: 2, 16, 256>}, {transform_indices = @transform_2, window_bounds = array<i64: 2, 16, 256>}, {transform_indices = @transform_3, window_bounds = array<i64: 2, 16, 1>}, {transform_indices = @transform_4, window_bounds = array<i64: 2, 16, 1>}, {pipeline_mode = #tpu.pipeline_mode<synchronous>, transform_indices = @transform_5, window_bounds = array<i64: 1, 1, 256>}, {transform_indices = @transform_6, window_bounds = array<i64: 1, 1, 1>}, {transform_indices = @transform_7, window_bounds = array<i64: 1, 1, 256>}]} {
    %c0_i32 = arith.constant 0 : i32
    %0 = arith.cmpi eq, %arg1, %c0_i32 : i32
    %1 = arith.extui %0 : i1 to i32
    %c0_i32_0 = arith.constant 0 : i32
    %2 = arith.cmpi ne, %1, %c0_i32_0 : i32
    scf.if %2 {
      %cst_40 = arith.constant 0.000000e+00 : f32
      %66 = vector.broadcast %cst_40 : f32 to vector<1x1x1xf32>
      %c0_41 = arith.constant 0 : index
      %c0_42 = arith.constant 0 : index
      %c0_43 = arith.constant 0 : index
      %67 = vector.load %arg10[%c0_41, %c0_42, %c0_43] : memref<1x1x1xf32, #tpu.memory_space<vmem>>, vector<1x1x1xf32>
      tpu.vector_store %arg10[%c0_41, %c0_42, %c0_43], %66 {strides = array<i32>} : memref<1x1x1xf32, #tpu.memory_space<vmem>>, vector<1x1x1xf32>,
      %cst_44 = arith.constant 0.000000e+00 : f32
      %68 = vector.broadcast %cst_44 : f32 to vector<1x1x256xf32>
      %c0_45 = arith.constant 0 : index
      %c0_46 = arith.constant 0 : index
      %c0_47 = arith.constant 0 : index
      %69 = vector.load %arg11[%c0_45, %c0_46, %c0_47] : memref<1x1x256xf32, #tpu.memory_space<vmem>>, vector<1x1x256xf32>
      tpu.vector_store %arg11[%c0_45, %c0_46, %c0_47], %68 {strides = array<i32>} : memref<1x1x256xf32, #tpu.memory_space<vmem>>, vector<1x1x256xf32>,
    } else {
    }
    %c0 = arith.constant 0 : index
    %3 = memref.load %arg2[%c0] : memref<1xf32, #tpu.memory_space<smem>>
    %cst = arith.constant 1.000000e+00 : f32
    %4 = arith.divf %cst, %3 : f32
    %c0_1 = arith.constant 0 : index
    %c0_2 = arith.constant 0 : index
    %c0_3 = arith.constant 0 : index
    %5 = vector.load %arg3[%c0_1, %c0_2, %c0_3] : memref<2x16x256xbf16, #tpu.memory_space<vmem>>, vector<2x16x256xbf16>
    %6 = arith.extf %5 : vector<2x16x256xbf16> to vector<2x16x256xf32>
    %cst_4 = arith.constant 1.000000e+01 : f32
    %7 = vector.broadcast %cst_4 : f32 to vector<2x16x256xf32>
    %8 = arith.mulf %6, %7 : vector<2x16x256xf32>
    %c0_5 = arith.constant 0 : index
    %c0_6 = arith.constant 0 : index
    %c0_7 = arith.constant 0 : index
    %9 = vector.load %arg7[%c0_5, %c0_6, %c0_7] : memref<1x1x256xf32, #tpu.memory_space<vmem>>, vector<1x1x256xf32>
    %c0_8 = arith.constant 0 : index
    %c0_9 = arith.constant 0 : index
    %c0_10 = arith.constant 0 : index
    %10 = vector.load %arg4[%c0_8, %c0_9, %c0_10] : memref<2x16x256xbf16, #tpu.memory_space<vmem>>, vector<2x16x256xbf16>
    %11 = arith.extf %10 : vector<2x16x256xbf16> to vector<2x16x256xf32>
    %12 = vector.broadcast %9 : vector<1x1x256xf32> to vector<2x16x256xf32>
    %13 = arith.subf %11, %12 : vector<2x16x256xf32>
    %14 = vector.broadcast %4 : f32 to vector<2x16x256xf32>
    %15 = arith.mulf %13, %14 : vector<2x16x256xf32>
    %cst_11 = arith.constant dense<0xFF800000> : vector<2x16xf32>
    %16 = vector.multi_reduction <maximumf>, %15, %cst_11 [2] : vector<2x16x256xf32> to vector<2x16xf32>
    %17 = vector.shape_cast %16 : vector<2x16xf32> to vector<2x16x1xf32>
    %18 = vector.broadcast %17 : vector<2x16x1xf32> to vector<2x16x256xf32>
    %19 = arith.subf %15, %18 : vector<2x16x256xf32>
    %20 = math.exp %19 : vector<2x16x256xf32>
    %cst_12 = arith.constant dense<0.000000e+00> : vector<2x16xf32>
    %21 = vector.multi_reduction <add>, %20, %cst_12 [2] : vector<2x16x256xf32> to vector<2x16xf32>
    %22 = vector.shape_cast %21 : vector<2x16xf32> to vector<2x16x1xf32>
    %23 = tpu.reciprocal %22 {approx = true} : vector<2x16x1xf32> -> vector<2x16x1xf32>
    %24 = arith.mulf %22, %23 : vector<2x16x1xf32>
    %cst_13 = arith.constant 2.000000e+00 : f32
    %25 = vector.broadcast %cst_13 : f32 to vector<2x16x1xf32>
    %26 = arith.subf %25, %24 : vector<2x16x1xf32>
    %27 = arith.mulf %23, %26 : vector<2x16x1xf32>
    %cst_14 = arith.constant dense<0xFF800000> : vector<2x16xf32>
    %28 = vector.multi_reduction <maximumf>, %8, %cst_14 [2] : vector<2x16x256xf32> to vector<2x16xf32>
    %29 = vector.shape_cast %28 : vector<2x16xf32> to vector<2x16x1xf32>
    %30 = vector.broadcast %29 : vector<2x16x1xf32> to vector<2x16x256xf32>
    %31 = arith.subf %8, %30 : vector<2x16x256xf32>
    %32 = math.exp %31 : vector<2x16x256xf32>
    %cst_15 = arith.constant dense<0.000000e+00> : vector<2x16xf32>
    %33 = vector.multi_reduction <add>, %32, %cst_15 [2] : vector<2x16x256xf32> to vector<2x16xf32>
    %34 = vector.shape_cast %33 : vector<2x16xf32> to vector<2x16x1xf32>
    %35 = math.log %34 : vector<2x16x1xf32>
    %36 = arith.mulf %20, %31 : vector<2x16x256xf32>
    %cst_16 = arith.constant dense<0.000000e+00> : vector<2x16xf32>
    %37 = vector.multi_reduction <add>, %36, %cst_16 [2] : vector<2x16x256xf32> to vector<2x16xf32>
    %38 = vector.shape_cast %37 : vector<2x16xf32> to vector<2x16x1xf32>
    %39 = arith.mulf %38, %27 : vector<2x16x1xf32>
    %40 = arith.mulf %22, %27 : vector<2x16x1xf32>
    %41 = arith.mulf %35, %40 : vector<2x16x1xf32>
    %42 = arith.subf %41, %39 : vector<2x16x1xf32>
    %c0_17 = arith.constant 0 : index
    %c0_18 = arith.constant 0 : index
    %c0_19 = arith.constant 0 : index
    %43 = vector.load %arg5[%c0_17, %c0_18, %c0_19] : memref<2x16x1xf32, #tpu.memory_space<vmem>>, vector<2x16x1xf32>
    %44 = arith.mulf %42, %43 : vector<2x16x1xf32>
    %cst_20 = arith.constant dense<0.000000e+00> : vector<2x1xf32>
    %45 = vector.multi_reduction <add>, %44, %cst_20 [1] : vector<2x16x1xf32> to vector<2x1xf32>
    %46 = vector.shape_cast %45 : vector<2x1xf32> to vector<2x1x1xf32>
    %c0_21 = arith.constant 0 : index
    %c0_22 = arith.constant 0 : index
    %c0_23 = arith.constant 0 : index
    %47 = vector.load %arg10[%c0_21, %c0_22, %c0_23] : memref<1x1x1xf32, #tpu.memory_space<vmem>>, vector<1x1x1xf32>
    %cst_24 = arith.constant dense<0.000000e+00> : vector<1x1xf32>
    %48 = vector.multi_reduction <add>, %46, %cst_24 [0] : vector<2x1x1xf32> to vector<1x1xf32>
    %49 = vector.shape_cast %48 : vector<1x1xf32> to vector<1x1x1xf32>
    %50 = arith.addf %47, %49 : vector<1x1x1xf32>
    %c0_25 = arith.constant 0 : index
    %c0_26 = arith.constant 0 : index
    %c0_27 = arith.constant 0 : index
    %51 = vector.load %arg10[%c0_25, %c0_26, %c0_27] : memref<1x1x1xf32, #tpu.memory_space<vmem>>, vector<1x1x1xf32>
    tpu.vector_store %arg10[%c0_25, %c0_26, %c0_27], %50 {strides = array<i32>} : memref<1x1x1xf32, #tpu.memory_space<vmem>>, vector<1x1x1xf32>,
    %c0_28 = arith.constant 0 : index
    %c0_29 = arith.constant 0 : index
    %c0_30 = arith.constant 0 : index
    %52 = vector.load %arg6[%c0_28, %c0_29, %c0_30] : memref<2x16x1xf32, #tpu.memory_space<vmem>>, vector<2x16x1xf32>
    %53 = arith.mulf %27, %52 : vector<2x16x1xf32>
    %54 = vector.broadcast %53 : vector<2x16x1xf32> to vector<2x16x256xf32>
    %55 = arith.mulf %20, %54 : vector<2x16x256xf32>
    %cst_31 = arith.constant dense<0.000000e+00> : vector<2x256xf32>
    %56 = vector.multi_reduction <add>, %55, %cst_31 [1] : vector<2x16x256xf32> to vector<2x256xf32>
    %57 = vector.shape_cast %56 : vector<2x256xf32> to vector<2x1x256xf32>
    %c0_32 = arith.constant 0 : index
    %c0_33 = arith.constant 0 : index
    %c0_34 = arith.constant 0 : index
    %58 = vector.load %arg11[%c0_32, %c0_33, %c0_34] : memref<1x1x256xf32, #tpu.memory_space<vmem>>, vector<1x1x256xf32>
    %cst_35 = arith.constant dense<0.000000e+00> : vector<1x256xf32>
    %59 = vector.multi_reduction <add>, %57, %cst_35 [0] : vector<2x1x256xf32> to vector<1x256xf32>
    %60 = vector.shape_cast %59 : vector<1x256xf32> to vector<1x1x256xf32>
    %61 = arith.addf %58, %60 : vector<1x1x256xf32>
    %c0_36 = arith.constant 0 : index
    %c0_37 = arith.constant 0 : index
    %c0_38 = arith.constant 0 : index
    %62 = vector.load %arg11[%c0_36, %c0_37, %c0_38] : memref<1x1x256xf32, #tpu.memory_space<vmem>>, vector<1x1x256xf32>
    tpu.vector_store %arg11[%c0_36, %c0_37, %c0_38], %61 {strides = array<i32>} : memref<1x1x256xf32, #tpu.memory_space<vmem>>, vector<1x1x256xf32>,
    %c1_i32 = arith.constant 1 : i32
    %63 = arith.cmpi eq, %arg1, %c1_i32 : i32
    %64 = arith.extui %63 : i1 to i32
    %c0_i32_39 = arith.constant 0 : i32
    %65 = arith.cmpi ne, %64, %c0_i32_39 : i32
    scf.if %65 {
      %c0_40 = arith.constant 0 : index
      %c0_41 = arith.constant 0 : index
      %c0_42 = arith.constant 0 : index
      %66 = vector.load %arg10[%c0_40, %c0_41, %c0_42] : memref<1x1x1xf32, #tpu.memory_space<vmem>>, vector<1x1x1xf32>
      %c0_43 = arith.constant 0 : index
      %c0_44 = arith.constant 0 : index
      %c0_45 = arith.constant 0 : index
      %67 = vector.load %arg8[%c0_43, %c0_44, %c0_45] : memref<1x1x1xf32, #tpu.memory_space<vmem>>, vector<1x1x1xf32>
      tpu.vector_store %arg8[%c0_43, %c0_44, %c0_45], %66 {strides = array<i32>} : memref<1x1x1xf32, #tpu.memory_space<vmem>>, vector<1x1x1xf32>,
      %c0_46 = arith.constant 0 : index
      %c0_47 = arith.constant 0 : index
      %c0_48 = arith.constant 0 : index
      %68 = vector.load %arg11[%c0_46, %c0_47, %c0_48] : memref<1x1x256xf32, #tpu.memory_space<vmem>>, vector<1x1x256xf32>
      %c0_49 = arith.constant 0 : index
      %c0_50 = arith.constant 0 : index
      %c0_51 = arith.constant 0 : index
      %69 = vector.load %arg9[%c0_49, %c0_50, %c0_51] : memref<1x1x256xf32, #tpu.memory_space<vmem>>, vector<1x1x256xf32>
      tpu.vector_store %arg9[%c0_49, %c0_50, %c0_51], %68 {strides = array<i32>} : memref<1x1x256xf32, #tpu.memory_space<vmem>>, vector<1x1x256xf32>,
    } else {
    }
    return
  }
  func.func @transform_0(%arg0: i32, %arg1: i32) -> i32 {
    %c0_i32 = arith.constant 0 : i32
    %c0_i32_0 = arith.constant 0 : i32
    return %c0_i32 : i32
  }
  func.func @transform_1(%arg0: i32, %arg1: i32) -> (i32, i32, i32) {
    %c2_i32 = arith.constant 2 : i32
    %0 = arith.muli %arg0, %c2_i32 : i32
    %1 = arith.addi %0, %arg1 : i32
    %c0_i32 = arith.constant 0 : i32
    %c0_i32_0 = arith.constant 0 : i32
    %c0_i32_1 = arith.constant 0 : i32
    return %c0_i32, %1, %c0_i32_0 : i32, i32, i32
  }
  func.func @transform_2(%arg0: i32, %arg1: i32) -> (i32, i32, i32) {
    %c2_i32 = arith.constant 2 : i32
    %0 = arith.muli %arg0, %c2_i32 : i32
    %1 = arith.addi %0, %arg1 : i32
    %c0_i32 = arith.constant 0 : i32
    %c0_i32_0 = arith.constant 0 : i32
    %c0_i32_1 = arith.constant 0 : i32
    return %c0_i32, %1, %c0_i32_0 : i32, i32, i32
  }
  func.func @transform_3(%arg0: i32, %arg1: i32) -> (i32, i32, i32) {
    %c2_i32 = arith.constant 2 : i32
    %0 = arith.muli %arg0, %c2_i32 : i32
    %1 = arith.addi %0, %arg1 : i32
    %c0_i32 = arith.constant 0 : i32
    %c0_i32_0 = arith.constant 0 : i32
    %c0_i32_1 = arith.constant 0 : i32
    return %c0_i32, %1, %c0_i32_0 : i32, i32, i32
  }
  func.func @transform_4(%arg0: i32, %arg1: i32) -> (i32, i32, i32) {
    %c2_i32 = arith.constant 2 : i32
    %0 = arith.muli %arg0, %c2_i32 : i32
    %1 = arith.addi %0, %arg1 : i32
    %c0_i32 = arith.constant 0 : i32
    %c0_i32_0 = arith.constant 0 : i32
    %c0_i32_1 = arith.constant 0 : i32
    return %c0_i32, %1, %c0_i32_0 : i32, i32, i32
  }
  func.func @transform_5(%arg0: i32, %arg1: i32) -> (i32, i32, i32) {
    %c0_i32 = arith.constant 0 : i32
    %c0_i32_0 = arith.constant 0 : i32
    %c0_i32_1 = arith.constant 0 : i32
    %c0_i32_2 = arith.constant 0 : i32
    return %c0_i32, %c0_i32_0, %c0_i32_1 : i32, i32, i32
  }
  func.func @transform_6(%arg0: i32, %arg1: i32) -> (i32, i32, i32) {
    %c0_i32 = arith.constant 0 : i32
    %c0_i32_0 = arith.constant 0 : i32
    %c0_i32_1 = arith.constant 0 : i32
    return %arg0, %c0_i32, %c0_i32_0 : i32, i32, i32
  }
  func.func @transform_7(%arg0: i32, %arg1: i32) -> (i32, i32, i32) {
    %c0_i32 = arith.constant 0 : i32
    %c0_i32_0 = arith.constant 0 : i32
    %c0_i32_1 = arith.constant 0 : i32
    return %arg0, %c0_i32, %c0_i32_0 : i32, i32, i32
  }
}

</mosaic_0001>

<llo_original>
// kernel: tpu_custom_call.1
$region0: #{tpu_custom_call.1}
  #allocation0 [shape = 'u32[]', space=smem, size = 0x4, offset = 0x4, fixed_abs, tag = 'smem constant byte address 0x4 - core index']
  #allocation1 [shape = 'u32[72,128]{1,0:T(1,128)}', space=vmem, size = 0x9000, scoped, tag = 'internal scratch']
  #allocation2 [shape = 'f32[1,1,1]{2,1,0:T(1,128)}', space=vmem, size = 0x200, scoped, tag = 'scratch operand']
  #allocation3 [shape = 'f32[1,1,256]{2,1,0:T(1,128)}', space=vmem, size = 0x400, scoped, tag = 'scratch operand']
  #allocation4 [shape = 'f32[1]{0:T(128)S(6)}', space=smem, size = 0x200, scoped, tag = 'scoped memory for tpu_custom_call.1']
  %s0 = inlined_call_operand.<no memory space> [shape: f32[1], index: 0, kind: input, shape index: {}]
  %s1 = inlined_call_operand.vmem [shape: bf16[2,64,256], index: 1, kind: input, shape index: {}]
  %s2 = inlined_call_operand.vmem [shape: bf16[2,64,256], index: 2, kind: input, shape index: {}]
  %s3 = inlined_call_operand.vmem [shape: f32[2,64,1], index: 3, kind: input, shape index: {}]
  %s4 = inlined_call_operand.vmem [shape: f32[2,64,1], index: 4, kind: input, shape index: {}]
  %s5 = inlined_call_operand.vmem [shape: f32[1,1,256], index: 5, kind: input, shape index: {}]
  %s6 = inlined_call_operand.vmem [shape: f32[2,1,1], index: 6, kind: output, shape index: {0}]
  %s7 = inlined_call_operand.hbm [shape: f32[2,1,256], index: 7, kind: output, shape index: {1}]
  %8 = xla_tuple %s6, %s7
  %s9 = sld [smem:[#allocation0]]
  $region225: #{tpu_custom_call.1} parent=0
    _
  %s11 = ssub.s32 1, %s9
  %s12 = scalar_select 0, %s11, %s9
  %13 = sst [smem:[#allocation4]] %s0
  $region1: #{tpu_custom_call.1} parent=0
    #allocation5 [shape = 'u8[32768]{0}', space=vmem, size = 0x8000, scoped, tag = 'input window, operand 1']
    #allocation6 [shape = 'u8[32768]{0}', space=vmem, size = 0x8000, scoped, tag = 'input window, operand 2']
    #allocation7 [shape = 'u8[32768]{0}', space=vmem, size = 0x8000, scoped, tag = 'input window, operand 3']
    #allocation8 [shape = 'u8[32768]{0}', space=vmem, size = 0x8000, scoped, tag = 'input window, operand 4']
    #allocation9 [shape = 'u8[2048]{0}', space=vmem, size = 0x800, scoped, tag = 'output window, operand 1']
    #allocation10 [shape = 's32[2]{0}', space=sflag, size = 0x8, scoped, tag = 'scoped memory for tpu_custom_call.1']
    %14 = vsyncpa [#allocation10], 0
    %s15 = scalar_lea.sflag [#allocation10], 1
    %16 = vsyncpa %s15, 0
    loop: start=0, step=1, limit=6
    $region2: #{tpu_custom_call.1} parent=1 // loop_pre_header
      _
    $region3: #{tpu_custom_call.1} parent=1 // loop_header
      %s18 = sphi 0, %s22
      %p19 = scmp.ge.s32.totalorder %s18, 6
      %s25 = sphi 0, %s37
      %s26 = sphi 0, %s33
      %s27 = sphi 0, %s25
      %s28 = sphi 0, %s26
      %s29 = sphi 0, %s27
      %s30 = sphi 0, %s28
      %s38 = sphi 0, %s38
      %s40 = sphi 0, %s38
      %s41 = sphi 0, %s40
      %s55 = sphi 0, %s41
      %s65 = sphi 0, %s67
      %s68 = sphi 0, %s65
      %s69 = sphi 0, %s68
      %s85 = sphi 0, %s69
      %s95 = sphi 0, %s97
      %s98 = sphi 0, %s95
      %s99 = sphi 0, %s98
      %s115 = sphi 0, %s99
      %s125 = sphi 0, %s127
      %s128 = sphi 0, %s125
      %s129 = sphi 0, %s128
      %s145 = sphi 0, %s129
      %s155 = sphi 0, %s157
      %s158 = sphi 0, %s155
      %s159 = sphi 0, %s158
      %s175 = sphi 0, %s159
      %s179 = sphi 0, %s179
      %s181 = sphi 0, %s179
      %s182 = sphi 0, %s181
      %s196 = sphi 0, %s182
      %s202 = sphi 0, %s204
      %s205 = sphi 0, %s202
      %s206 = sphi 0, %s205
      %s222 = sphi 0, %s206
      %s228 = sphi 0, %s230
      %s231 = sphi 0, %s228
      %s232 = sphi 0, %s231
      %s248 = sphi 0, %s232
    $region4: #{tpu_custom_call.1} parent=1 // loop_header_branch
      %21 = sbr.rel (%p19) target = $region8
    $region5: #{tpu_custom_call.1} parent=1 // loop_body
      %s23 = ssub.s32 %s18, 1
      %s24 = ssub.s32 %s18, 2
      %s31 = sadd.s32 1, %s26
      %p32 = scmp.ge.s32.totalorder %s31, 2
      %s33 = scalar_select %p32, 0, %s31
      %s34 = sadd.s32 1, %s25
      %s35 = scalar_select %p32, %s34, %s25
      %p36 = scmp.ge.s32.totalorder %s35, 2
      %s37 = scalar_select %p36, 0, %s35
      %s39 = sadd.s32 %s38, 1
      %p42 = scmp.eq.s32.totalorder %s18, 3
      %p43 = scmp.ne.s32.totalorder %s38, %s40
      %p44 = scmp.eq.s32.totalorder %s18, 0
      %p45 = por %p43, %p44
      %p46 = scmp.ne.s32.totalorder %s38, %s40
      %p47 = scmp.eq.s32.totalorder %s23, 3
      %p48 = por %p46, %p47
      %p49 = scmp.ne.s32.totalorder %s40, %s41
      %p50 = scmp.eq.s32.totalorder %s23, 0
      %p51 = por %p49, %p50
      %p52 = scmp.ne.s32.totalorder %s40, %s41
      %p53 = scmp.eq.s32.totalorder %s24, 3
      %p54 = por %p52, %p53
      %p56 = scmp.ne.s32.totalorder %s41, %s55
      %p57 = scmp.eq.s32.totalorder %s24, 0
      %p58 = por %p56, %p57
      %s59 = smul.u32 %s25, 2
      %s60 = sadd.s32 %s59, %s26
      %s61 = smul.u32 %s37, 2
      %s62 = sadd.s32 %s61, %s33
      %s63 = ssub.s32 %s60, %s62
      %p64 = scmp.eq.s32.totalorder %s63, 0
      %s66 = sadd.s32 %s65, 1
      %s67 = scalar_select %p64, %s65, %s66
      %p70 = pneg %p64
      %p71 = scmp.eq.s32.totalorder %s18, 3
      %p72 = por %p70, %p71
      %p73 = scmp.ne.s32.totalorder %s65, %s68
      %p74 = scmp.eq.s32.totalorder %s18, 0
      %p75 = por %p73, %p74
      %p76 = scmp.ne.s32.totalorder %s65, %s68
      %p77 = scmp.eq.s32.totalorder %s23, 3
      %p78 = por %p76, %p77
      %p79 = scmp.ne.s32.totalorder %s68, %s69
      %p80 = scmp.eq.s32.totalorder %s23, 0
      %p81 = por %p79, %p80
      %p82 = scmp.ne.s32.totalorder %s68, %s69
      %p83 = scmp.eq.s32.totalorder %s24, 3
      %p84 = por %p82, %p83
      %p86 = scmp.ne.s32.totalorder %s69, %s85
      %p87 = scmp.eq.s32.totalorder %s24, 0
      %p88 = por %p86, %p87
      %s89 = smul.u32 %s25, 2
      %s90 = sadd.s32 %s89, %s26
      %s91 = smul.u32 %s37, 2
      %s92 = sadd.s32 %s91, %s33
      %s93 = ssub.s32 %s90, %s92
      %p94 = scmp.eq.s32.totalorder %s93, 0
      %s96 = sadd.s32 %s95, 1
      %s97 = scalar_select %p94, %s95, %s96
      %p100 = pneg %p94
      %p101 = scmp.eq.s32.totalorder %s18, 3
      %p102 = por %p100, %p101
      %p103 = scmp.ne.s32.totalorder %s95, %s98
      %p104 = scmp.eq.s32.totalorder %s18, 0
      %p105 = por %p103, %p104
      %p106 = scmp.ne.s32.totalorder %s95, %s98
      %p107 = scmp.eq.s32.totalorder %s23, 3
      %p108 = por %p106, %p107
      %p109 = scmp.ne.s32.totalorder %s98, %s99
      %p110 = scmp.eq.s32.totalorder %s23, 0
      %p111 = por %p109, %p110
      %p112 = scmp.ne.s32.totalorder %s98, %s99
      %p113 = scmp.eq.s32.totalorder %s24, 3
      %p114 = por %p112, %p113
      %p116 = scmp.ne.s32.totalorder %s99, %s115
      %p117 = scmp.eq.s32.totalorder %s24, 0
      %p118 = por %p116, %p117
      %s119 = smul.u32 %s25, 2
      %s120 = sadd.s32 %s119, %s26
      %s121 = smul.u32 %s37, 2
      %s122 = sadd.s32 %s121, %s33
      %s123 = ssub.s32 %s120, %s122
      %p124 = scmp.eq.s32.totalorder %s123, 0
      %s126 = sadd.s32 %s125, 1
      %s127 = scalar_select %p124, %s125, %s126
      %p130 = pneg %p124
      %p131 = scmp.eq.s32.totalorder %s18, 3
      %p132 = por %p130, %p131
      %p133 = scmp.ne.s32.totalorder %s125, %s128
      %p134 = scmp.eq.s32.totalorder %s18, 0
      %p135 = por %p133, %p134
      %p136 = scmp.ne.s32.totalorder %s125, %s128
      %p137 = scmp.eq.s32.totalorder %s23, 3
      %p138 = por %p136, %p137
      %p139 = scmp.ne.s32.totalorder %s128, %s129
      %p140 = scmp.eq.s32.totalorder %s23, 0
      %p141 = por %p139, %p140
      %p142 = scmp.ne.s32.totalorder %s128, %s129
      %p143 = scmp.eq.s32.totalorder %s24, 3
      %p144 = por %p142, %p143
      %p146 = scmp.ne.s32.totalorder %s129, %s145
      %p147 = scmp.eq.s32.totalorder %s24, 0
      %p148 = por %p146, %p147
      %s149 = smul.u32 %s25, 2
      %s150 = sadd.s32 %s149, %s26
      %s151 = smul.u32 %s37, 2
      %s152 = sadd.s32 %s151, %s33
      %s153 = ssub.s32 %s150, %s152
      %p154 = scmp.eq.s32.totalorder %s153, 0
      %s156 = sadd.s32 %s155, 1
      %s157 = scalar_select %p154, %s155, %s156
      %p160 = pneg %p154
      %p161 = scmp.eq.s32.totalorder %s18, 3
      %p162 = por %p160, %p161
      %p163 = scmp.ne.s32.totalorder %s155, %s158
      %p164 = scmp.eq.s32.totalorder %s18, 0
      %p165 = por %p163, %p164
      %p166 = scmp.ne.s32.totalorder %s155, %s158
      %p167 = scmp.eq.s32.totalorder %s23, 3
      %p168 = por %p166, %p167
      %p169 = scmp.ne.s32.totalorder %s158, %s159
      %p170 = scmp.eq.s32.totalorder %s23, 0
      %p171 = por %p169, %p170
      %p172 = scmp.ne.s32.totalorder %s158, %s159
      %p173 = scmp.eq.s32.totalorder %s24, 3
      %p174 = por %p172, %p173
      %p176 = scmp.ne.s32.totalorder %s159, %s175
      %p177 = scmp.eq.s32.totalorder %s24, 0
      %p178 = por %p176, %p177
      %s180 = sadd.s32 %s179, 1
      %p183 = scmp.eq.s32.totalorder %s18, 3
      %p184 = scmp.ne.s32.totalorder %s179, %s181
      %p185 = scmp.eq.s32.totalorder %s18, 0
      %p186 = por %p184, %p185
      %p187 = scmp.ne.s32.totalorder %s179, %s181
      %p188 = scmp.eq.s32.totalorder %s23, 3
      %p189 = por %p187, %p188
      %p190 = scmp.ne.s32.totalorder %s181, %s182
      %p191 = scmp.eq.s32.totalorder %s23, 0
      %p192 = por %p190, %p191
      %p193 = scmp.ne.s32.totalorder %s181, %s182
      %p194 = scmp.eq.s32.totalorder %s24, 3
      %p195 = por %p193, %p194
      %p197 = scmp.ne.s32.totalorder %s182, %s196
      %p198 = scmp.eq.s32.totalorder %s24, 0
      %p199 = por %p197, %p198
      %s200 = ssub.s32 %s25, %s37
      %p201 = scmp.eq.s32.totalorder %s200, 0
      %s203 = sadd.s32 %s202, 1
      %s204 = scalar_select %p201, %s202, %s203
      %p207 = pneg %p201
      %p208 = scmp.eq.s32.totalorder %s18, 3
      %p209 = por %p207, %p208
      %p210 = scmp.ne.s32.totalorder %s202, %s205
      %p211 = scmp.eq.s32.totalorder %s18, 0
      %p212 = por %p210, %p211
      %p213 = scmp.ne.s32.totalorder %s202, %s205
      %p214 = scmp.eq.s32.totalorder %s23, 3
      %p215 = por %p213, %p214
      %p216 = scmp.ne.s32.totalorder %s205, %s206
      %p217 = scmp.eq.s32.totalorder %s23, 0
      %p218 = por %p216, %p217
      %p219 = scmp.ne.s32.totalorder %s205, %s206
      %p220 = scmp.eq.s32.totalorder %s24, 3
      %p221 = por %p219, %p220
      %p223 = scmp.ne.s32.totalorder %s206, %s222
      %p224 = scmp.eq.s32.totalorder %s24, 0
      %p225 = por %p223, %p224
      %s226 = ssub.s32 %s25, %s37
      %p227 = scmp.eq.s32.totalorder %s226, 0
      %s229 = sadd.s32 %s228, 1
      %s230 = scalar_select %p227, %s228, %s229
      %p233 = pneg %p227
      %p234 = scmp.eq.s32.totalorder %s18, 3
      %p235 = por %p233, %p234
      %p236 = scmp.ne.s32.totalorder %s228, %s231
      %p237 = scmp.eq.s32.totalorder %s18, 0
      %p238 = por %p236, %p237
      %p239 = scmp.ne.s32.totalorder %s228, %s231
      %p240 = scmp.eq.s32.totalorder %s23, 3
      %p241 = por %p239, %p240
      %p242 = scmp.ne.s32.totalorder %s231, %s232
      %p243 = scmp.eq.s32.totalorder %s23, 0
      %p244 = por %p242, %p243
      %p245 = scmp.ne.s32.totalorder %s231, %s232
      %p246 = scmp.eq.s32.totalorder %s24, 3
      %p247 = por %p245, %p246
      %p249 = scmp.ne.s32.totalorder %s232, %s248
      %p250 = scmp.eq.s32.totalorder %s24, 0
      %p251 = por %p249, %p250
      %p252 = scmp.le.s32.totalorder 1, %s18
      %p253 = scmp.lt.s32.totalorder %s18, 5
      %p254 = pnand %p252, %p253
      %p255 = pneg %p254
      // Predicated region
      $region9: #{tpu_custom_call.1} parent=5 // pred_check
        _
      $region10: #{tpu_custom_call.1} parent=5 // pred_check_branch
        %257 = sbr.rel (%p254) target = $region12
      $region11: #{tpu_custom_call.1} parent=5 // pred_region
        %s258 = ssub.s32 %s18, 1
        // Predicated region
        $region13: #{tpu_custom_call.1} parent=11 // pred_check
          %p259 = pneg %p51
        $region14: #{tpu_custom_call.1} parent=11 // pred_check_branch
          %261 = sbr.rel (%p259) target = $region16
        $region15: #{tpu_custom_call.1} parent=11 // pred_region
          _
        $region16: #{tpu_custom_call.1} parent=11 // pred_fallthru
          _
        // Predicated region
        $region17: #{tpu_custom_call.1} parent=11 // pred_check
          %p262 = pneg %p192
        $region18: #{tpu_custom_call.1} parent=11 // pred_check_branch
          %264 = sbr.rel (%p262) target = $region20
        $region19: #{tpu_custom_call.1} parent=11 // pred_region
          _
        $region20: #{tpu_custom_call.1} parent=11 // pred_fallthru
          _
      $region12: #{tpu_custom_call.1} parent=5 // pred_fallthru
        _
      %p265 = scmp.lt.s32.totalorder %s18, 4
      // Predicated region
      $region21: #{tpu_custom_call.1} parent=5 // pred_check
        %p266 = pneg %p265
      $region22: #{tpu_custom_call.1} parent=5 // pred_check_branch
        %268 = sbr.rel (%p266) target = $region24
      $region23: #{tpu_custom_call.1} parent=5 // pred_region
        // Predicated region
        $region25: #{tpu_custom_call.1} parent=23 // pred_check
          %p269 = pneg %p75
        $region26: #{tpu_custom_call.1} parent=23 // pred_check_branch
          %271 = sbr.rel (%p269) target = $region28
        $region27: #{tpu_custom_call.1} parent=23 // pred_region
          %s272 = sand.u32 %s65, 1
          %s273 = sand.u32 %s65, 1
          %s274 = smul.addr %s273, 32
          %s275 = scalar_lea.vmem [#allocation5], %s274
          %s276 = smul.u32 %s25, 2
          %s277 = sadd.s32 %s276, %s26
          %s278 = smul.u32 2, %s277
          %s279 = smul.addr %s278, 2
          %s280 = smul.addr %s279, 4
          %s281 = scalar_lea.vmem %s1, %s280
          // Predicated region
          $region29: #{tpu_custom_call.1} parent=27 // pred_check
            _
          $region30: #{tpu_custom_call.1} parent=27 // pred_check_branch
            %283 = sbr.rel (0) target = $region32
          $region31: #{tpu_custom_call.1} parent=27 // pred_region
            // Predicated region
            $region33: #{tpu_custom_call.1} parent=31 // pred_check
              _
            $region34: #{tpu_custom_call.1} parent=31 // pred_check_branch
              %285 = sbr.rel (0) target = $region36
            $region35: #{tpu_custom_call.1} parent=31 // pred_region
              // Predicated region
              $region48: #{tpu_custom_call.1} parent=35 // pred_check
                _
              $region49: #{tpu_custom_call.1} parent=35 // pred_check_branch
                %307 = sbr.rel (0) target = $region51
              $region50: #{tpu_custom_call.1} parent=35 // pred_region
                loop: start=0, step=1, limit=1
                $region52: #{tpu_custom_call.1} parent=50 // loop_pre_header
                  _
                $region53: #{tpu_custom_call.1} parent=50 // loop_header
                  %s309 = sphi 0, %s313
                  %p310 = scmp.ge.s32.totalorder %s309, 1
                  %s314 = sphi %s281, %s281
                  %s315 = sphi %s275, %s275
                $region54: #{tpu_custom_call.1} parent=50 // loop_header_branch
                  %312 = sbr.rel (%p310) target = $region58
                $region55: #{tpu_custom_call.1} parent=50 // loop_body
                  %v316 = vld [vmem:[%s314] sm:$0xff]
                  %317 = vst [vmem:[%s315] sm:$0xff] %v316
                  %v318 = vld [vmem:[%s314 + $0x8] sm:$0xff]
                  %319 = vst [vmem:[%s315 + $0x8] sm:$0xff] %v318
                  %v320 = vld [vmem:[%s314 + $0x40] sm:$0xff]
                  %321 = vst [vmem:[%s315 + $0x10] sm:$0xff] %v320
                  %v322 = vld [vmem:[%s314 + $0x48] sm:$0xff]
                  %323 = vst [vmem:[%s315 + $0x18] sm:$0xff] %v322
                $region56: #{tpu_custom_call.1} parent=50 // loop_footer
                  %s313 = sadd.s32 1, %s309
                $region57: #{tpu_custom_call.1} parent=50 // loop_footer_branch
                  %308 = sbr.rel target = $region53
                $region58: #{tpu_custom_call.1} parent=50 // loop_exit
                  _
              $region51: #{tpu_custom_call.1} parent=35 // pred_fallthru
                _
              // Predicated region
              $region59: #{tpu_custom_call.1} parent=35 // pred_check
                _
              $region60: #{tpu_custom_call.1} parent=35 // pred_check_branch
                %325 = sbr.rel target = $region62
              $region61: #{tpu_custom_call.1} parent=35 // pred_region
                _
              $region62: #{tpu_custom_call.1} parent=35 // pred_fallthru
                _
            $region36: #{tpu_custom_call.1} parent=31 // pred_fallthru
              _
            // Predicated region
            $region37: #{tpu_custom_call.1} parent=31 // pred_check
              _
            $region38: #{tpu_custom_call.1} parent=31 // pred_check_branch
              %287 = sbr.rel target = $region40
            $region39: #{tpu_custom_call.1} parent=31 // pred_region
              %s289 = ssub.s32 256, 1
              loop: start=0, step=1, limit=1
              $region41: #{tpu_custom_call.1} parent=39 // loop_pre_header
                _
              $region42: #{tpu_custom_call.1} parent=39 // loop_header
                %s291 = sphi 0, %s295
                %p292 = scmp.ge.s32.totalorder %s291, 1
                %s296 = sphi %s281, %s281
                %s297 = sphi %s275, %s275
              $region43: #{tpu_custom_call.1} parent=39 // loop_header_branch
                %294 = sbr.rel (%p292) target = $region47
              $region44: #{tpu_custom_call.1} parent=39 // loop_body
                %v298 = vld [vmem:[%s296] sm:%s289]
                %299 = vst [vmem:[%s297] sm:%s289] %v298
                %v300 = vld [vmem:[%s296 + $0x8] sm:%s289]
                %301 = vst [vmem:[%s297 + $0x8] sm:%s289] %v300
                %v302 = vld [vmem:[%s296 + $0x40] sm:%s289]
                %303 = vst [vmem:[%s297 + $0x10] sm:%s289] %v302
                %v304 = vld [vmem:[%s296 + $0x48] sm:%s289]
                %305 = vst [vmem:[%s297 + $0x18] sm:%s289] %v304
              $region45: #{tpu_custom_call.1} parent=39 // loop_footer
                %s295 = sadd.s32 1, %s291
              $region46: #{tpu_custom_call.1} parent=39 // loop_footer_branch
                %290 = sbr.rel target = $region42
              $region47: #{tpu_custom_call.1} parent=39 // loop_exit
                _
            $region40: #{tpu_custom_call.1} parent=31 // pred_fallthru
              _
          $region32: #{tpu_custom_call.1} parent=27 // pred_fallthru
            _
          %326 = vnop
        $region28: #{tpu_custom_call.1} parent=23 // pred_fallthru
          _
        // Predicated region
        $region63: #{tpu_custom_call.1} parent=23 // pred_check
          %p327 = pneg %p105
        $region64: #{tpu_custom_call.1} parent=23 // pred_check_branch
          %329 = sbr.rel (%p327) target = $region66
        $region65: #{tpu_custom_call.1} parent=23 // pred_region
          %s330 = sand.u32 %s95, 1
          %s331 = sand.u32 %s95, 1
          %s332 = smul.addr %s331, 32
          %s333 = scalar_lea.vmem [#allocation6], %s332
          %s334 = smul.u32 %s25, 2
          %s335 = sadd.s32 %s334, %s26
          %s336 = smul.u32 2, %s335
          %s337 = smul.addr %s336, 2
          %s338 = smul.addr %s337, 4
          %s339 = scalar_lea.vmem %s2, %s338
          // Predicated region
          $region67: #{tpu_custom_call.1} parent=65 // pred_check
            _
          $region68: #{tpu_custom_call.1} parent=65 // pred_check_branch
            %341 = sbr.rel (0) target = $region70
          $region69: #{tpu_custom_call.1} parent=65 // pred_region
            // Predicated region
            $region71: #{tpu_custom_call.1} parent=69 // pred_check
              _
            $region72: #{tpu_custom_call.1} parent=69 // pred_check_branch
              %343 = sbr.rel (0) target = $region74
            $region73: #{tpu_custom_call.1} parent=69 // pred_region
              // Predicated region
              $region86: #{tpu_custom_call.1} parent=73 // pred_check
                _
              $region87: #{tpu_custom_call.1} parent=73 // pred_check_branch
                %365 = sbr.rel (0) target = $region89
              $region88: #{tpu_custom_call.1} parent=73 // pred_region
                loop: start=0, step=1, limit=1
                $region90: #{tpu_custom_call.1} parent=88 // loop_pre_header
                  _
                $region91: #{tpu_custom_call.1} parent=88 // loop_header
                  %s367 = sphi 0, %s371
                  %p368 = scmp.ge.s32.totalorder %s367, 1
                  %s372 = sphi %s339, %s339
                  %s373 = sphi %s333, %s333
                $region92: #{tpu_custom_call.1} parent=88 // loop_header_branch
                  %370 = sbr.rel (%p368) target = $region96
                $region93: #{tpu_custom_call.1} parent=88 // loop_body
                  %v374 = vld [vmem:[%s372] sm:$0xff]
                  %375 = vst [vmem:[%s373] sm:$0xff] %v374
                  %v376 = vld [vmem:[%s372 + $0x8] sm:$0xff]
                  %377 = vst [vmem:[%s373 + $0x8] sm:$0xff] %v376
                  %v378 = vld [vmem:[%s372 + $0x40] sm:$0xff]
                  %379 = vst [vmem:[%s373 + $0x10] sm:$0xff] %v378
                  %v380 = vld [vmem:[%s372 + $0x48] sm:$0xff]
                  %381 = vst [vmem:[%s373 + $0x18] sm:$0xff] %v380
                $region94: #{tpu_custom_call.1} parent=88 // loop_footer
                  %s371 = sadd.s32 1, %s367
                $region95: #{tpu_custom_call.1} parent=88 // loop_footer_branch
                  %366 = sbr.rel target = $region91
                $region96: #{tpu_custom_call.1} parent=88 // loop_exit
                  _
              $region89: #{tpu_custom_call.1} parent=73 // pred_fallthru
                _
              // Predicated region
              $region97: #{tpu_custom_call.1} parent=73 // pred_check
                _
              $region98: #{tpu_custom_call.1} parent=73 // pred_check_branch
                %383 = sbr.rel target = $region100
              $region99: #{tpu_custom_call.1} parent=73 // pred_region
                _
              $region100: #{tpu_custom_call.1} parent=73 // pred_fallthru
                _
            $region74: #{tpu_custom_call.1} parent=69 // pred_fallthru
              _
            // Predicated region
            $region75: #{tpu_custom_call.1} parent=69 // pred_check
              _
            $region76: #{tpu_custom_call.1} parent=69 // pred_check_branch
              %345 = sbr.rel target = $region78
            $region77: #{tpu_custom_call.1} parent=69 // pred_region
              %s347 = ssub.s32 256, 1
              loop: start=0, step=1, limit=1
              $region79: #{tpu_custom_call.1} parent=77 // loop_pre_header
                _
              $region80: #{tpu_custom_call.1} parent=77 // loop_header
                %s349 = sphi 0, %s353
                %p350 = scmp.ge.s32.totalorder %s349, 1
                %s354 = sphi %s339, %s339
                %s355 = sphi %s333, %s333
              $region81: #{tpu_custom_call.1} parent=77 // loop_header_branch
                %352 = sbr.rel (%p350) target = $region85
              $region82: #{tpu_custom_call.1} parent=77 // loop_body
                %v356 = vld [vmem:[%s354] sm:%s347]
                %357 = vst [vmem:[%s355] sm:%s347] %v356
                %v358 = vld [vmem:[%s354 + $0x8] sm:%s347]
                %359 = vst [vmem:[%s355 + $0x8] sm:%s347] %v358
                %v360 = vld [vmem:[%s354 + $0x40] sm:%s347]
                %361 = vst [vmem:[%s355 + $0x10] sm:%s347] %v360
                %v362 = vld [vmem:[%s354 + $0x48] sm:%s347]
                %363 = vst [vmem:[%s355 + $0x18] sm:%s347] %v362
              $region83: #{tpu_custom_call.1} parent=77 // loop_footer
                %s353 = sadd.s32 1, %s349
              $region84: #{tpu_custom_call.1} parent=77 // loop_footer_branch
                %348 = sbr.rel target = $region80
              $region85: #{tpu_custom_call.1} parent=77 // loop_exit
                _
            $region78: #{tpu_custom_call.1} parent=69 // pred_fallthru
              _
          $region70: #{tpu_custom_call.1} parent=65 // pred_fallthru
            _
          %384 = vnop
        $region66: #{tpu_custom_call.1} parent=23 // pred_fallthru
          _
        // Predicated region
        $region101: #{tpu_custom_call.1} parent=23 // pred_check
          %p385 = pneg %p135
        $region102: #{tpu_custom_call.1} parent=23 // pred_check_branch
          %387 = sbr.rel (%p385) target = $region104
        $region103: #{tpu_custom_call.1} parent=23 // pred_region
          %s388 = sand.u32 %s125, 1
          %s389 = sand.u32 %s125, 1
          %s390 = smul.addr %s389, 32
          %s391 = scalar_lea.vmem [#allocation7], %s390
          %s392 = smul.u32 %s25, 2
          %s393 = sadd.s32 %s392, %s26
          %s394 = smul.u32 2, %s393
          %s395 = smul.addr %s394, 8
          %s396 = scalar_lea.vmem %s3, %s395
          // Predicated region
          $region105: #{tpu_custom_call.1} parent=103 // pred_check
            _
          $region106: #{tpu_custom_call.1} parent=103 // pred_check_branch
            %398 = sbr.rel (0) target = $region108
          $region107: #{tpu_custom_call.1} parent=103 // pred_region
            // Predicated region
            $region109: #{tpu_custom_call.1} parent=107 // pred_check
              _
            $region110: #{tpu_custom_call.1} parent=107 // pred_check_branch
              %400 = sbr.rel (0) target = $region112
            $region111: #{tpu_custom_call.1} parent=107 // pred_region
              // Predicated region
              $region124: #{tpu_custom_call.1} parent=111 // pred_check
                _
              $region125: #{tpu_custom_call.1} parent=111 // pred_check_branch
                %422 = sbr.rel (0) target = $region127
              $region126: #{tpu_custom_call.1} parent=111 // pred_region
                loop: start=0, step=1, limit=1
                $region128: #{tpu_custom_call.1} parent=126 // loop_pre_header
                  _
                $region129: #{tpu_custom_call.1} parent=126 // loop_header
                  %s424 = sphi 0, %s428
                  %p425 = scmp.ge.s32.totalorder %s424, 1
                  %s429 = sphi %s396, %s396
                  %s430 = sphi %s391, %s391
                $region130: #{tpu_custom_call.1} parent=126 // loop_header_branch
                  %427 = sbr.rel (%p425) target = $region134
                $region131: #{tpu_custom_call.1} parent=126 // loop_body
                  %v431 = vld [vmem:[%s429] sm:$0xff]
                  %432 = vst [vmem:[%s430] sm:$0xff] %v431
                  %v433 = vld [vmem:[%s429 + $0x8] sm:$0xff]
                  %434 = vst [vmem:[%s430 + $0x8] sm:$0xff] %v433
                  %v435 = vld [vmem:[%s429 + $0x40] sm:$0xff]
                  %436 = vst [vmem:[%s430 + $0x10] sm:$0xff] %v435
                  %v437 = vld [vmem:[%s429 + $0x48] sm:$0xff]
                  %438 = vst [vmem:[%s430 + $0x18] sm:$0xff] %v437
                $region132: #{tpu_custom_call.1} parent=126 // loop_footer
                  %s428 = sadd.s32 1, %s424
                $region133: #{tpu_custom_call.1} parent=126 // loop_footer_branch
                  %423 = sbr.rel target = $region129
                $region134: #{tpu_custom_call.1} parent=126 // loop_exit
                  _
              $region127: #{tpu_custom_call.1} parent=111 // pred_fallthru
                _
              // Predicated region
              $region135: #{tpu_custom_call.1} parent=111 // pred_check
                _
              $region136: #{tpu_custom_call.1} parent=111 // pred_check_branch
                %440 = sbr.rel target = $region138
              $region137: #{tpu_custom_call.1} parent=111 // pred_region
                _
              $region138: #{tpu_custom_call.1} parent=111 // pred_fallthru
                _
            $region112: #{tpu_custom_call.1} parent=107 // pred_fallthru
              _
            // Predicated region
            $region113: #{tpu_custom_call.1} parent=107 // pred_check
              _
            $region114: #{tpu_custom_call.1} parent=107 // pred_check_branch
              %402 = sbr.rel target = $region116
            $region115: #{tpu_custom_call.1} parent=107 // pred_region
              %s404 = ssub.s32 256, 1
              loop: start=0, step=1, limit=1
              $region117: #{tpu_custom_call.1} parent=115 // loop_pre_header
                _
              $region118: #{tpu_custom_call.1} parent=115 // loop_header
                %s406 = sphi 0, %s410
                %p407 = scmp.ge.s32.totalorder %s406, 1
                %s411 = sphi %s396, %s396
                %s412 = sphi %s391, %s391
              $region119: #{tpu_custom_call.1} parent=115 // loop_header_branch
                %409 = sbr.rel (%p407) target = $region123
              $region120: #{tpu_custom_call.1} parent=115 // loop_body
                %v413 = vld [vmem:[%s411] sm:%s404]
                %414 = vst [vmem:[%s412] sm:%s404] %v413
                %v415 = vld [vmem:[%s411 + $0x8] sm:%s404]
                %416 = vst [vmem:[%s412 + $0x8] sm:%s404] %v415
                %v417 = vld [vmem:[%s411 + $0x40] sm:%s404]
                %418 = vst [vmem:[%s412 + $0x10] sm:%s404] %v417
                %v419 = vld [vmem:[%s411 + $0x48] sm:%s404]
                %420 = vst [vmem:[%s412 + $0x18] sm:%s404] %v419
              $region121: #{tpu_custom_call.1} parent=115 // loop_footer
                %s410 = sadd.s32 1, %s406
              $region122: #{tpu_custom_call.1} parent=115 // loop_footer_branch
                %405 = sbr.rel target = $region118
              $region123: #{tpu_custom_call.1} parent=115 // loop_exit
                _
            $region116: #{tpu_custom_call.1} parent=107 // pred_fallthru
              _
          $region108: #{tpu_custom_call.1} parent=103 // pred_fallthru
            _
          %441 = vnop
        $region104: #{tpu_custom_call.1} parent=23 // pred_fallthru
          _
        // Predicated region
        $region139: #{tpu_custom_call.1} parent=23 // pred_check
          %p442 = pneg %p165
        $region140: #{tpu_custom_call.1} parent=23 // pred_check_branch
          %444 = sbr.rel (%p442) target = $region142
        $region141: #{tpu_custom_call.1} parent=23 // pred_region
          %s445 = sand.u32 %s155, 1
          %s446 = sand.u32 %s155, 1
          %s447 = smul.addr %s446, 32
          %s448 = scalar_lea.vmem [#allocation8], %s447
          %s449 = smul.u32 %s25, 2
          %s450 = sadd.s32 %s449, %s26
          %s451 = smul.u32 2, %s450
          %s452 = smul.addr %s451, 8
          %s453 = scalar_lea.vmem %s4, %s452
          // Predicated region
          $region143: #{tpu_custom_call.1} parent=141 // pred_check
            _
          $region144: #{tpu_custom_call.1} parent=141 // pred_check_branch
            %455 = sbr.rel (0) target = $region146
          $region145: #{tpu_custom_call.1} parent=141 // pred_region
            // Predicated region
            $region147: #{tpu_custom_call.1} parent=145 // pred_check
              _
            $region148: #{tpu_custom_call.1} parent=145 // pred_check_branch
              %457 = sbr.rel (0) target = $region150
            $region149: #{tpu_custom_call.1} parent=145 // pred_region
              // Predicated region
              $region162: #{tpu_custom_call.1} parent=149 // pred_check
                _
              $region163: #{tpu_custom_call.1} parent=149 // pred_check_branch
                %479 = sbr.rel (0) target = $region165
              $region164: #{tpu_custom_call.1} parent=149 // pred_region
                loop: start=0, step=1, limit=1
                $region166: #{tpu_custom_call.1} parent=164 // loop_pre_header
                  _
                $region167: #{tpu_custom_call.1} parent=164 // loop_header
                  %s481 = sphi 0, %s485
                  %p482 = scmp.ge.s32.totalorder %s481, 1
                  %s486 = sphi %s453, %s453
                  %s487 = sphi %s448, %s448
                $region168: #{tpu_custom_call.1} parent=164 // loop_header_branch
                  %484 = sbr.rel (%p482) target = $region172
                $region169: #{tpu_custom_call.1} parent=164 // loop_body
                  %v488 = vld [vmem:[%s486] sm:$0xff]
                  %489 = vst [vmem:[%s487] sm:$0xff] %v488
                  %v490 = vld [vmem:[%s486 + $0x8] sm:$0xff]
                  %491 = vst [vmem:[%s487 + $0x8] sm:$0xff] %v490
                  %v492 = vld [vmem:[%s486 + $0x40] sm:$0xff]
                  %493 = vst [vmem:[%s487 + $0x10] sm:$0xff] %v492
                  %v494 = vld [vmem:[%s486 + $0x48] sm:$0xff]
                  %495 = vst [vmem:[%s487 + $0x18] sm:$0xff] %v494
                $region170: #{tpu_custom_call.1} parent=164 // loop_footer
                  %s485 = sadd.s32 1, %s481
                $region171: #{tpu_custom_call.1} parent=164 // loop_footer_branch
                  %480 = sbr.rel target = $region167
                $region172: #{tpu_custom_call.1} parent=164 // loop_exit
                  _
              $region165: #{tpu_custom_call.1} parent=149 // pred_fallthru
                _
              // Predicated region
              $region173: #{tpu_custom_call.1} parent=149 // pred_check
                _
              $region174: #{tpu_custom_call.1} parent=149 // pred_check_branch
                %497 = sbr.rel target = $region176
              $region175: #{tpu_custom_call.1} parent=149 // pred_region
                _
              $region176: #{tpu_custom_call.1} parent=149 // pred_fallthru
                _
            $region150: #{tpu_custom_call.1} parent=145 // pred_fallthru
              _
            // Predicated region
            $region151: #{tpu_custom_call.1} parent=145 // pred_check
              _
            $region152: #{tpu_custom_call.1} parent=145 // pred_check_branch
              %459 = sbr.rel target = $region154
            $region153: #{tpu_custom_call.1} parent=145 // pred_region
              %s461 = ssub.s32 256, 1
              loop: start=0, step=1, limit=1
              $region155: #{tpu_custom_call.1} parent=153 // loop_pre_header
                _
              $region156: #{tpu_custom_call.1} parent=153 // loop_header
                %s463 = sphi 0, %s467
                %p464 = scmp.ge.s32.totalorder %s463, 1
                %s468 = sphi %s453, %s453
                %s469 = sphi %s448, %s448
              $region157: #{tpu_custom_call.1} parent=153 // loop_header_branch
                %466 = sbr.rel (%p464) target = $region161
              $region158: #{tpu_custom_call.1} parent=153 // loop_body
                %v470 = vld [vmem:[%s468] sm:%s461]
                %471 = vst [vmem:[%s469] sm:%s461] %v470
                %v472 = vld [vmem:[%s468 + $0x8] sm:%s461]
                %473 = vst [vmem:[%s469 + $0x8] sm:%s461] %v472
                %v474 = vld [vmem:[%s468 + $0x40] sm:%s461]
                %475 = vst [vmem:[%s469 + $0x10] sm:%s461] %v474
                %v476 = vld [vmem:[%s468 + $0x48] sm:%s461]
                %477 = vst [vmem:[%s469 + $0x18] sm:%s461] %v476
              $region159: #{tpu_custom_call.1} parent=153 // loop_footer
                %s467 = sadd.s32 1, %s463
              $region160: #{tpu_custom_call.1} parent=153 // loop_footer_branch
                %462 = sbr.rel target = $region156
              $region161: #{tpu_custom_call.1} parent=153 // loop_exit
                _
            $region154: #{tpu_custom_call.1} parent=145 // pred_fallthru
              _
          $region146: #{tpu_custom_call.1} parent=141 // pred_fallthru
            _
          %498 = vnop
        $region142: #{tpu_custom_call.1} parent=23 // pred_fallthru
          _
      $region24: #{tpu_custom_call.1} parent=5 // pred_fallthru
        _
      %p499 = scmp.le.s32.totalorder 1, %s18
      %p500 = scmp.lt.s32.totalorder %s18, 5
      %p501 = pnand %p499, %p500
      %p502 = pneg %p501
      // Predicated region
      $region177: #{tpu_custom_call.1} parent=5 // pred_check
        _
      $region178: #{tpu_custom_call.1} parent=5 // pred_check_branch
        %504 = sbr.rel (%p501) target = $region180
      $region179: #{tpu_custom_call.1} parent=5 // pred_region
        %s505 = ssub.s32 %s18, 1
        %s506 = sand.u32 %s68, 1
        %s507 = sand.u32 %s68, 1
        %s508 = smul.addr %s507, 32
        %s509 = scalar_lea.vmem [#allocation5], %s508
        // Predicated region
        $region181: #{tpu_custom_call.1} parent=179 // pred_check
          %p510 = pneg %p81
        $region182: #{tpu_custom_call.1} parent=179 // pred_check_branch
          %512 = sbr.rel (%p510) target = $region184
        $region183: #{tpu_custom_call.1} parent=179 // pred_region
          _
        $region184: #{tpu_custom_call.1} parent=179 // pred_fallthru
          _
        %s513 = sand.u32 %s98, 1
        %s514 = sand.u32 %s98, 1
        %s515 = smul.addr %s514, 32
        %s516 = scalar_lea.vmem [#allocation6], %s515
        // Predicated region
        $region185: #{tpu_custom_call.1} parent=179 // pred_check
          %p517 = pneg %p111
        $region186: #{tpu_custom_call.1} parent=179 // pred_check_branch
          %519 = sbr.rel (%p517) target = $region188
        $region187: #{tpu_custom_call.1} parent=179 // pred_region
          _
        $region188: #{tpu_custom_call.1} parent=179 // pred_fallthru
          _
        %s520 = sand.u32 %s128, 1
        %s521 = sand.u32 %s128, 1
        %s522 = smul.addr %s521, 32
        %s523 = scalar_lea.vmem [#allocation7], %s522
        // Predicated region
        $region189: #{tpu_custom_call.1} parent=179 // pred_check
          %p524 = pneg %p141
        $region190: #{tpu_custom_call.1} parent=179 // pred_check_branch
          %526 = sbr.rel (%p524) target = $region192
        $region191: #{tpu_custom_call.1} parent=179 // pred_region
          _
        $region192: #{tpu_custom_call.1} parent=179 // pred_fallthru
          _
        %s527 = sand.u32 %s158, 1
        %s528 = sand.u32 %s158, 1
        %s529 = smul.addr %s528, 32
        %s530 = scalar_lea.vmem [#allocation8], %s529
        // Predicated region
        $region193: #{tpu_custom_call.1} parent=179 // pred_check
          %p531 = pneg %p171
        $region194: #{tpu_custom_call.1} parent=179 // pred_check_branch
          %533 = sbr.rel (%p531) target = $region196
        $region195: #{tpu_custom_call.1} parent=179 // pred_region
          _
        $region196: #{tpu_custom_call.1} parent=179 // pred_fallthru
          _
        %p534 = pneg %p51
        %p535 = pneg %p48
        %s536 = sand.u32 %s68, 1
        %s537 = sand.u32 %s68, 1
        %s538 = smul.addr %s537, 32
        %s539 = scalar_lea.vmem [#allocation5], %s538
        %p540 = pneg %p81
        %p541 = pneg %p78
        %s542 = sand.u32 %s98, 1
        %s543 = sand.u32 %s98, 1
        %s544 = smul.addr %s543, 32
        %s545 = scalar_lea.vmem [#allocation6], %s544
        %p546 = pneg %p111
        %p547 = pneg %p108
        %s548 = sand.u32 %s128, 1
        %s549 = sand.u32 %s128, 1
        %s550 = smul.addr %s549, 32
        %s551 = scalar_lea.vmem [#allocation7], %s550
        %p552 = pneg %p141
        %p553 = pneg %p138
        %s554 = sand.u32 %s158, 1
        %s555 = sand.u32 %s158, 1
        %s556 = smul.addr %s555, 32
        %s557 = scalar_lea.vmem [#allocation8], %s556
        %p558 = pneg %p171
        %p559 = pneg %p168
        %p560 = pneg %p192
        %p561 = pneg %p189
        %p562 = pneg %p218
        %p563 = pneg %p215
        %p564 = scmp.lt.s32.totalorder %s27, 1
        %s565 = scalar_select %p564, %s27, 1
        %s566 = scalar_lea.vmem %s6, %s565
        %p567 = pneg %p244
        %p568 = pneg %p241
        %s569 = sand.u32 %s231, 1
        %s570 = scalar_lea.sflag [#allocation10], %s569
        %s571 = sand.u32 %s231, 1
        %s572 = smul.addr %s571, 2
        %s573 = scalar_lea.vmem [#allocation9], %s572
        %s574 = smul.u32 %s27, 2
        %s575 = sadd.s32 %s574, %s28
        %s576 = smul.u32 2, %s575
        %s577 = smul.u32 %s27, 2
        %s578 = sadd.s32 %s577, %s28
        %s579 = smul.u32 2, %s578
        %s580 = smul.u32 %s27, 2
        %s581 = sadd.s32 %s580, %s28
        %s582 = smul.u32 2, %s581
        %s583 = smul.u32 %s27, 2
        %s584 = sadd.s32 %s583, %s28
        %s585 = smul.u32 2, %s584
        %p586 = scmp.lt.s32.totalorder %s27, 1
        %s587 = scalar_select %p586, %s27, 1
        %s588 = scalar_lea.vmem %s6, %s587
        %p589 = scmp.eq.s32.totalorder %s28, 0
        // Predicated region
        $region197: #{tpu_custom_call.1} parent=179 // pred_check
          %p590 = pneg %p589
        $region198: #{tpu_custom_call.1} parent=179 // pred_check_branch
          %592 = sbr.rel (%p590) target = $region200
        $region199: #{tpu_custom_call.1} parent=179 // pred_region
          %vm593 = vcmask 0
          %594 = vst.msk [vmem:[#allocation2] sm:$0x1] %vm593, 0.0
          %v595 = vlaneseq
          %vm596 = vcmp.ge.s32.totalorder %v595, 0
          %vm597 = vcmp.lt.s32.totalorder %v595, 256
          %vm598 = vmand %vm596, %vm597
          %599 = vst.msk [vmem:[#allocation3] sm:$0x3] %vm598, 0.0
        $region200: #{tpu_custom_call.1} parent=179 // pred_fallthru
          _
        %s600 = sld [smem:[#allocation4]]
        %v601 = vstv %s600
        %v602 = vrcp.pop %v601
        %v603 = vmul.f32 %v601, %v602
        %v604 = vsub.f32 1.0, %v603
        %v605 = vmul.f32 %v602, %v604
        %v606 = vadd.f32 %v602, %v605
        %vm607 = vweird.f32 %v601
        %vm608 = vweird.f32 %v602
        %vm609 = vmor %vm607, %vm608
        %v610 = vsel %vm609, %v602, %v606
        %v611 = vand.u32 2147483647, %v601
        %vm612 = vcmp.eq.f32.partialorder %v611, 8.507059e+37
        %v613 = vand.u32 %v601, 2147483648
        %v614 = vor.u32 1.1754944e-38, %v613
        %v615 = vsel %vm612, %v614, %v610
        %s616 = vtos %v615
        %v617 = vld [vmem:[%s509] sm:$0xff]
        %v618 = vld [vmem:[%s509 + $0x8] sm:$0xff]
        %v619 = vld [vmem:[%s509 + $0x10] sm:$0xff]
        %v620 = vld [vmem:[%s509 + $0x18] sm:$0xff]
        %v621 = vunpack.c.l.bf16 %v617
        %v622 = vunpack.c.h.bf16 %v617
        %v623 = vunpack.c.l.bf16 %v618
        %v624 = vunpack.c.h.bf16 %v618
        %v625 = vunpack.c.l.bf16 %v619
        %v626 = vunpack.c.h.bf16 %v619
        %v627 = vunpack.c.l.bf16 %v620
        %v628 = vunpack.c.h.bf16 %v620
        %v629 = vmul.f32 %v621, 10.0
        %v630 = vmul.f32 %v622, 10.0
        %v631 = vmul.f32 %v623, 10.0
        %v632 = vmul.f32 %v624, 10.0
        %v633 = vmul.f32 %v625, 10.0
        %v634 = vmul.f32 %v626, 10.0
        %v635 = vmul.f32 %v627, 10.0
        %v636 = vmul.f32 %v628, 10.0
        %v637 = vld [vmem:[%s5] sm:$0x3]
        %v638 = vld [vmem:[%s516] sm:$0xff]
        %v639 = vld [vmem:[%s516 + $0x8] sm:$0xff]
        %v640 = vld [vmem:[%s516 + $0x10] sm:$0xff]
        %v641 = vld [vmem:[%s516 + $0x18] sm:$0xff]
        %v642 = vunpack.c.l.bf16 %v638
        %v643 = vunpack.c.h.bf16 %v638
        %v644 = vunpack.c.l.bf16 %v639
        %v645 = vunpack.c.h.bf16 %v639
        %v646 = vunpack.c.l.bf16 %v640
        %v647 = vunpack.c.h.bf16 %v640
        %v648 = vunpack.c.l.bf16 %v641
        %v649 = vunpack.c.h.bf16 %v641
        %v651 = vperm.slane %v637, 0
        %v652 = vperm.slane %v637, 1
        %v655 = vsub.f32 %v642, %v651
        %v656 = vsub.f32 %v643, %v652
        %v657 = vsub.f32 %v644, %v651
        %v658 = vsub.f32 %v645, %v652
        %v659 = vsub.f32 %v646, %v651
        %v660 = vsub.f32 %v647, %v652
        %v661 = vsub.f32 %v648, %v651
        %v662 = vsub.f32 %v649, %v652
        %v663 = vstv %s616
        %v664 = vmul.f32 %v655, %v663
        %v665 = vmul.f32 %v656, %v663
        %v666 = vmul.f32 %v657, %v663
        %v667 = vmul.f32 %v658, %v663
        %v668 = vmul.f32 %v659, %v663
        %v669 = vmul.f32 %v660, %v663
        %v670 = vmul.f32 %v661, %v663
        %v671 = vmul.f32 %v662, %v663
        %v672 = vmax.f32 %v664, %v665
        %673 = vmax.xlane.f32.xlu0 %v672
        %v674 = vpop.xlane.xlu0 %673
        %v675 = vmax.f32 %v666, %v667
        %676 = vmax.xlane.f32.xlu0 %v675
        %v677 = vpop.xlane.xlu0 %676
        %v678 = vmax.f32 %v668, %v669
        %679 = vmax.xlane.f32.xlu0 %v678
        %v680 = vpop.xlane.xlu0 %679
        %v681 = vmax.f32 %v670, %v671
        %682 = vmax.xlane.f32.xlu0 %v681
        %v683 = vpop.xlane.xlu0 %682
        %v684 = vsub.f32 %v664, %v674
        %v685 = vsub.f32 %v665, %v674
        %v686 = vsub.f32 %v666, %v677
        %v687 = vsub.f32 %v667, %v677
        %v688 = vsub.f32 %v668, %v680
        %v689 = vsub.f32 %v669, %v680
        %v690 = vsub.f32 %v670, %v683
        %v691 = vsub.f32 %v671, %v683
        %v692 = vmul.f32 %v684, 1.442695
        %v693 = vpow.pop %v692
        %v694 = vmul.f32 %v685, 1.442695
        %v695 = vpow.pop %v694
        %v696 = vmul.f32 %v686, 1.442695
        %v697 = vpow.pop %v696
        %v698 = vmul.f32 %v687, 1.442695
        %v699 = vpow.pop %v698
        %v700 = vmul.f32 %v688, 1.442695
        %v701 = vpow.pop %v700
        %v702 = vmul.f32 %v689, 1.442695
        %v703 = vpow.pop %v702
        %v704 = vmul.f32 %v690, 1.442695
        %v705 = vpow.pop %v704
        %v706 = vmul.f32 %v691, 1.442695
        %v707 = vpow.pop %v706
        %v708 = vadd.f32 %v693, %v695
        %709 = vadd.xlane.f32.xlu0 %v708
        %v710 = vpop.xlane.xlu0 %709
        %v711 = vadd.f32 %v697, %v699
        %712 = vadd.xlane.f32.xlu0 %v711
        %v713 = vpop.xlane.xlu0 %712
        %v714 = vadd.f32 %v701, %v703
        %715 = vadd.xlane.f32.xlu0 %v714
        %v716 = vpop.xlane.xlu0 %715
        %v717 = vadd.f32 %v705, %v707
        %718 = vadd.xlane.f32.xlu0 %v717
        %v719 = vpop.xlane.xlu0 %718
        %v720 = vrcp.pop %v710
        %v721 = vrcp.pop %v713
        %v722 = vrcp.pop %v716
        %v723 = vrcp.pop %v719
        %v724 = vmul.f32 %v710, %v720
        %v725 = vmul.f32 %v713, %v721
        %v726 = vmul.f32 %v716, %v722
        %v727 = vmul.f32 %v719, %v723
        %v728 = vsub.f32 2.0, %v724
        %v729 = vsub.f32 2.0, %v725
        %v730 = vsub.f32 2.0, %v726
        %v731 = vsub.f32 2.0, %v727
        %v732 = vmul.f32 %v720, %v728
        %v733 = vmul.f32 %v721, %v729
        %v734 = vmul.f32 %v722, %v730
        %v735 = vmul.f32 %v723, %v731
        %v736 = vmax.f32 %v629, %v630
        %737 = vmax.xlane.f32.xlu0 %v736
        %v738 = vpop.xlane.xlu0 %737
        %v739 = vmax.f32 %v631, %v632
        %740 = vmax.xlane.f32.xlu0 %v739
        %v741 = vpop.xlane.xlu0 %740
        %v742 = vmax.f32 %v633, %v634
        %743 = vmax.xlane.f32.xlu0 %v742
        %v744 = vpop.xlane.xlu0 %743
        %v745 = vmax.f32 %v635, %v636
        %746 = vmax.xlane.f32.xlu0 %v745
        %v747 = vpop.xlane.xlu0 %746
        %v748 = vsub.f32 %v629, %v738
        %v749 = vsub.f32 %v630, %v738
        %v750 = vsub.f32 %v631, %v741
        %v751 = vsub.f32 %v632, %v741
        %v752 = vsub.f32 %v633, %v744
        %v753 = vsub.f32 %v634, %v744
        %v754 = vsub.f32 %v635, %v747
        %v755 = vsub.f32 %v636, %v747
        %v756 = vmul.f32 %v748, 1.442695
        %v757 = vpow.pop %v756
        %v758 = vmul.f32 %v749, 1.442695
        %v759 = vpow.pop %v758
        %v760 = vmul.f32 %v750, 1.442695
        %v761 = vpow.pop %v760
        %v762 = vmul.f32 %v751, 1.442695
        %v763 = vpow.pop %v762
        %v764 = vmul.f32 %v752, 1.442695
        %v765 = vpow.pop %v764
        %v766 = vmul.f32 %v753, 1.442695
        %v767 = vpow.pop %v766
        %v768 = vmul.f32 %v754, 1.442695
        %v769 = vpow.pop %v768
        %v770 = vmul.f32 %v755, 1.442695
        %v771 = vpow.pop %v770
        %v772 = vadd.f32 %v757, %v759
        %773 = vadd.xlane.f32.xlu0 %v772
        %v774 = vpop.xlane.xlu0 %773
        %v775 = vadd.f32 %v761, %v763
        %776 = vadd.xlane.f32.xlu0 %v775
        %v777 = vpop.xlane.xlu0 %776
        %v778 = vadd.f32 %v765, %v767
        %779 = vadd.xlane.f32.xlu0 %v778
        %v780 = vpop.xlane.xlu0 %779
        %v781 = vadd.f32 %v769, %v771
        %782 = vadd.xlane.f32.xlu0 %v781
        %v783 = vpop.xlane.xlu0 %782
        %v784 = vlog2.pop %v774
        %v785 = vmul.f32 %v784, 0.6931472
        %v786 = vlog2.pop %v777
        %v787 = vmul.f32 %v786, 0.6931472
        %v788 = vlog2.pop %v780
        %v789 = vmul.f32 %v788, 0.6931472
        %v790 = vlog2.pop %v783
        %v791 = vmul.f32 %v790, 0.6931472
        %v792 = vmul.f32 %v693, %v748
        %v793 = vmul.f32 %v695, %v749
        %v794 = vmul.f32 %v697, %v750
        %v795 = vmul.f32 %v699, %v751
        %v796 = vmul.f32 %v701, %v752
        %v797 = vmul.f32 %v703, %v753
        %v798 = vmul.f32 %v705, %v754
        %v799 = vmul.f32 %v707, %v755
        %v800 = vadd.f32 %v792, %v793
        %801 = vadd.xlane.f32.xlu0 %v800
        %v802 = vpop.xlane.xlu0 %801
        %v803 = vadd.f32 %v794, %v795
        %804 = vadd.xlane.f32.xlu0 %v803
        %v805 = vpop.xlane.xlu0 %804
        %v806 = vadd.f32 %v796, %v797
        %807 = vadd.xlane.f32.xlu0 %v806
        %v808 = vpop.xlane.xlu0 %807
        %v809 = vadd.f32 %v798, %v799
        %810 = vadd.xlane.f32.xlu0 %v809
        %v811 = vpop.xlane.xlu0 %810
        %v812 = vmul.f32 %v802, %v732
        %v813 = vmul.f32 %v805, %v733
        %v814 = vmul.f32 %v808, %v734
        %v815 = vmul.f32 %v811, %v735
        %v816 = vmul.f32 %v710, %v732
        %v817 = vmul.f32 %v713, %v733
        %v818 = vmul.f32 %v716, %v734
        %v819 = vmul.f32 %v719, %v735
        %v820 = vmul.f32 %v785, %v816
        %v821 = vmul.f32 %v787, %v817
        %v822 = vmul.f32 %v789, %v818
        %v823 = vmul.f32 %v791, %v819
        %v824 = vsub.f32 %v820, %v812
        %v825 = vsub.f32 %v821, %v813
        %v826 = vsub.f32 %v822, %v814
        %v827 = vsub.f32 %v823, %v815
        %v828 = vld [vmem:[%s523] sm:$0xff]
        %v829 = vld [vmem:[%s523 + $0x8] sm:$0xff]
        %v830 = vld [vmem:[%s523 + $0x10] sm:$0xff]
        %v831 = vld [vmem:[%s523 + $0x18] sm:$0xff]
        %v832 = vmul.f32 %v824, %v828
        %v833 = vmul.f32 %v825, %v829
        %v834 = vmul.f32 %v826, %v830
        %v835 = vmul.f32 %v827, %v831
        %vm836 = vcmask 7168
        %v837 = vsel %vm836, %v832, 0.0
        %v838 = vsel %vm836, %v833, 0.0
        %v839 = vadd.f32 %v837, %v838
        %v840 = vrot.slane %v839, 4
        %v841 = vadd.f32 %v839, %v840
        %v842 = vrot.slane %v841, 2
        %v843 = vadd.f32 %v841, %v842
        %v844 = vrot.slane %v843, 1
        %v845 = vadd.f32 %v843, %v844
        %v846 = vsel %vm836, %v834, 0.0
        %v847 = vsel %vm836, %v835, 0.0
        %v848 = vadd.f32 %v846, %v847
        %v849 = vrot.slane %v848, 4
        %v850 = vadd.f32 %v848, %v849
        %v851 = vrot.slane %v850, 2
        %v852 = vadd.f32 %v850, %v851
        %v853 = vrot.slane %v852, 1
        %v854 = vadd.f32 %v852, %v853
        %v855 = vld [vmem:[#allocation2] sm:$0x1]
        %v856 = vsel %vm836, %v845, 0.0
        %v857 = vsel %vm836, %v854, 0.0
        %v858 = vadd.f32 %v856, %v857
        %v859 = vadd.f32 %v855, %v858
        %vm860 = vcmask 0
        %861 = vst.msk [vmem:[#allocation2] sm:$0x1] %vm860, %v859
        %v862 = vld [vmem:[%s530] sm:$0xff]
        %v863 = vld [vmem:[%s530 + $0x8] sm:$0xff]
        %v864 = vld [vmem:[%s530 + $0x10] sm:$0xff]
        %v865 = vld [vmem:[%s530 + $0x18] sm:$0xff]
        %v866 = vmul.f32 %v732, %v862
        %v867 = vmul.f32 %v733, %v863
        %v868 = vmul.f32 %v734, %v864
        %v869 = vmul.f32 %v735, %v865
        %871 = vset.pattern.permute.xlu0 0
        %872 = vperm.xlu0 %871, %v866
        %v873 = vpop.permute.xlu0 %872
        %876 = vset.pattern.permute.xlu0 0
        %877 = vperm.xlu0 %876, %v867
        %v878 = vpop.permute.xlu0 %877
        %881 = vset.pattern.permute.xlu0 0
        %882 = vperm.xlu0 %881, %v868
        %v883 = vpop.permute.xlu0 %882
        %886 = vset.pattern.permute.xlu0 0
        %887 = vperm.xlu0 %886, %v869
        %v888 = vpop.permute.xlu0 %887
        %v890 = vmul.f32 %v693, %v873
        %v891 = vmul.f32 %v695, %v873
        %v892 = vmul.f32 %v697, %v878
        %v893 = vmul.f32 %v699, %v878
        %v894 = vmul.f32 %v701, %v883
        %v895 = vmul.f32 %v703, %v883
        %v896 = vmul.f32 %v705, %v888
        %v897 = vmul.f32 %v707, %v888
        %v898 = vadd.f32 %v890, %v892
        %v899 = vrot.slane %v898, 4
        %v900 = vadd.f32 %v898, %v899
        %v901 = vrot.slane %v900, 2
        %v902 = vadd.f32 %v900, %v901
        %v903 = vrot.slane %v902, 1
        %v904 = vadd.f32 %v902, %v903
        %v905 = vadd.f32 %v891, %v893
        %v906 = vrot.slane %v905, 4
        %v907 = vadd.f32 %v905, %v906
        %v908 = vrot.slane %v907, 2
        %v909 = vadd.f32 %v907, %v908
        %v910 = vrot.slane %v909, 1
        %v911 = vadd.f32 %v909, %v910
        %v912 = vadd.f32 %v894, %v896
        %v913 = vrot.slane %v912, 4
        %v914 = vadd.f32 %v912, %v913
        %v915 = vrot.slane %v914, 2
        %v916 = vadd.f32 %v914, %v915
        %v917 = vrot.slane %v916, 1
        %v918 = vadd.f32 %v916, %v917
        %v919 = vadd.f32 %v895, %v897
        %v920 = vrot.slane %v919, 4
        %v921 = vadd.f32 %v919, %v920
        %v922 = vrot.slane %v921, 2
        %v923 = vadd.f32 %v921, %v922
        %v924 = vrot.slane %v923, 1
        %v925 = vadd.f32 %v923, %v924
        %v926 = vld [vmem:[#allocation3] sm:$0x3]
        %v927 = vadd.f32 %v904, %v918
        %v928 = vadd.f32 %v911, %v925
        %v931 = vrot.slane %v928, 7
        %vm932 = vcmask 1040384
        %v933 = vsel %vm932, %v927, %v931
        %v935 = vadd.f32 %v926, %v933
        %v936 = vlaneseq
        %vm937 = vcmp.ge.s32.totalorder %v936, 0
        %vm938 = vcmp.lt.s32.totalorder %v936, 256
        %vm939 = vmand %vm937, %vm938
        %940 = vst.msk [vmem:[#allocation3] sm:$0x3] %vm939, %v935
        %p941 = scmp.eq.s32.totalorder %s28, 1
        // Predicated region
        $region201: #{tpu_custom_call.1} parent=179 // pred_check
          %p942 = pneg %p941
        $region202: #{tpu_custom_call.1} parent=179 // pred_check_branch
          %944 = sbr.rel (%p942) target = $region204
        $region203: #{tpu_custom_call.1} parent=179 // pred_region
          %v945 = vld [vmem:[#allocation2] sm:$0x1]
          %946 = vst.msk [vmem:[%s588] sm:$0x1] %vm860, %v945
          %v947 = vld [vmem:[#allocation3] sm:$0x3]
          %948 = vst.msk [vmem:[%s573] sm:$0x3] %vm939, %v947
        $region204: #{tpu_custom_call.1} parent=179 // pred_fallthru
          _
        %p949 = scmp.lt.s32.totalorder %s27, 1
        %s950 = scalar_select %p949, %s27, 1
        %s951 = scalar_lea.vmem %s6, %s950
        %s952 = sand.u32 %s231, 1
        %s953 = scalar_lea.sflag [#allocation10], %s952
        %s954 = sand.u32 %s231, 1
        %s955 = smul.addr %s954, 2
        %s956 = scalar_lea.vmem [#allocation9], %s955
        // Predicated region
        $region205: #{tpu_custom_call.1} parent=179 // pred_check
          %p957 = pneg %p215
        $region206: #{tpu_custom_call.1} parent=179 // pred_check_branch
          %959 = sbr.rel (%p957) target = $region208
        $region207: #{tpu_custom_call.1} parent=179 // pred_region
          _
        $region208: #{tpu_custom_call.1} parent=179 // pred_fallthru
          _
        // Predicated region
        $region209: #{tpu_custom_call.1} parent=179 // pred_check
          %p960 = pneg %p241
        $region210: #{tpu_custom_call.1} parent=179 // pred_check_branch
          %962 = sbr.rel (%p960) target = $region212
        $region211: #{tpu_custom_call.1} parent=179 // pred_region
          %964 = vsyncadd %s953, 0
          %s965 = smul.addr %s27, 2
          %s966 = scalar_lea.hbm %s7, %s965
          %s968 = sshll.u32 %s956, 4
          %s969 = int_to_ptr.vmem [resolvable:$true] %s968
          %s970 = sshll.u32 %s966, 4
          %s971 = int_to_ptr.hbm [resolvable:$true] %s970
          %973 = dma.vmem_to_hbm [thread:$0]  %s969, 32, %s971, %s953
        $region212: #{tpu_custom_call.1} parent=179 // pred_fallthru
          _
      $region180: #{tpu_custom_call.1} parent=5 // pred_fallthru
        _
      %p974 = scmp.le.s32.totalorder 2, %s18
      // Predicated region
      $region213: #{tpu_custom_call.1} parent=5 // pred_check
        %p975 = pneg %p974
      $region214: #{tpu_custom_call.1} parent=5 // pred_check_branch
        %977 = sbr.rel (%p975) target = $region216
      $region215: #{tpu_custom_call.1} parent=5 // pred_region
        %s978 = ssub.s32 %s18, 2
        // Predicated region
        $region217: #{tpu_custom_call.1} parent=215 // pred_check
          %p979 = pneg %p221
        $region218: #{tpu_custom_call.1} parent=215 // pred_check_branch
          %981 = sbr.rel (%p979) target = $region220
        $region219: #{tpu_custom_call.1} parent=215 // pred_region
          %p982 = scmp.lt.s32.totalorder %s29, 1
          %s983 = scalar_select %p982, %s29, 1
          %s984 = scalar_lea.vmem %s6, %s983
        $region220: #{tpu_custom_call.1} parent=215 // pred_fallthru
          _
        // Predicated region
        $region221: #{tpu_custom_call.1} parent=215 // pred_check
          %p985 = pneg %p247
        $region222: #{tpu_custom_call.1} parent=215 // pred_check_branch
          %987 = sbr.rel (%p985) target = $region224
        $region223: #{tpu_custom_call.1} parent=215 // pred_region
          %s988 = sand.u32 %s232, 1
          %s989 = scalar_lea.sflag [#allocation10], %s988
          %s990 = sand.u32 %s232, 1
          %s991 = smul.addr %s990, 2
          %s992 = scalar_lea.vmem [#allocation9], %s991
          %994 = dma.done %s989, 32
        $region224: #{tpu_custom_call.1} parent=215 // pred_fallthru
          _
      $region216: #{tpu_custom_call.1} parent=5 // pred_fallthru
        _
    $region6: #{tpu_custom_call.1} parent=1 // loop_footer
      %s22 = sadd.s32 1, %s18
    $region7: #{tpu_custom_call.1} parent=1 // loop_footer_branch
      %17 = sbr.rel target = $region3
    $region8: #{tpu_custom_call.1} parent=1 // loop_exit
      _
    %995 = vsyncpa [#allocation10], 1
    %s996 = scalar_lea.sflag [#allocation10], 1
    %997 = vsyncpa %s996, 1

</llo_original>
